<compile_context>
chip_gen: v7x
topology: tpu7x:2x2x1
jax: 0.10.0
libtpu: 0.0.40
codegen_flags: <defaults>
</compile_context>

<pallas_src>
import functools

import jax
import jax.numpy as jnp
from jax.experimental import pallas as pl
from jax.experimental.pallas import tpu as pltpu


def _attn_softmax_kernel(q_ref, enc_ref, out_ref):
    # q:   [tB, H]      query (hid, or hid @ W for the 'general' method)
    # enc: [S, tB, H]   encoder outputs in their native seq-major layout
    # out: [tB, S]      softmax(scores) -- lane-dense store
    q = q_ref[...]
    enc = enc_ref[...]

    # scores[s, b] = sum_h enc[s, b, h] * q[b, h]   (f32 accumulation)
    prod = (enc * q[None, :, :]).astype(jnp.float32)
    scores_sb = jnp.sum(prod, axis=-1)          # [S, tB]
    scores = scores_sb.T                        # [tB, S] tiny in-VMEM transpose

    # softmax over the sequence axis (lanes)
    m = jnp.max(scores, axis=-1, keepdims=True)
    e = jnp.exp(scores - m)
    denom = jnp.sum(e, axis=-1, keepdims=True)
    out_ref[...] = (e * pl.reciprocal(denom, approx=True)).astype(out_ref.dtype)


def _pick_batch_tile(B, S, H, itemsize, budget_bytes=6 * 1024 * 1024):
    """Largest batch tile whose enc block fits the per-buffer VMEM budget and
    satisfies the (8, 128) sublane rule (multiple of 8, or the full batch)."""
    if B * S * H * itemsize <= budget_bytes:
        return B
    tB = (budget_bytes // (S * H * itemsize)) // 8 * 8
    return int(min(max(tB, 8), B))


@functools.partial(jax.jit, static_argnames=("method",))
def attention_forward(hidden, encoder_outputs, w=None, b=None, *, method="general"):
    """hidden: [1, B, H], encoder_outputs: [S, B, H]  ->  [B, 1, S]."""
    if method not in ("dot", "general"):
        raise ValueError(method, "is not an appropriate attention method.")

    S, B, H = encoder_outputs.shape
    hid = hidden[0]  # [B, H]

    if method == "general":
        # score = hid . (enc W^T + b) = (hid W) . enc + const_b; softmax over S
        # is shift-invariant so the bias term vanishes exactly.  This tiny
        # O(B*H^2) projection is done once here so W never has to be DMA'd
        # into the kernel (and no [B,S,H] energy buffer is ever materialized).
        query = jnp.dot(hid, w, preferred_element_type=jnp.float32).astype(hid.dtype)
    else:
        query = hid

    tB = _pick_batch_tile(B, S, H, encoder_outputs.dtype.itemsize)
    grid = (pl.cdiv(B, tB),)

    probs = pl.pallas_call(
        _attn_softmax_kernel,
        out_shape=jax.ShapeDtypeStruct((B, S), encoder_outputs.dtype),
        grid=grid,
        in_specs=[
            pl.BlockSpec((tB, H), lambda ib: (ib, 0)),        # query [B, H]
            pl.BlockSpec((S, tB, H), lambda ib: (0, ib, 0)),  # enc   [S, B, H] (native)
        ],
        out_specs=pl.BlockSpec((tB, S), lambda ib: (ib, 0)),  # lane-dense [B, S]
        compiler_params=pltpu.CompilerParams(
            dimension_semantics=("parallel",),
            vmem_limit_bytes=32 * 1024 * 1024,
        ),
    )(query, encoder_outputs)

    return probs[:, None, :]  # [B, 1, S] -- free reshape keeps the kernel store lane-dense


def _reference(hidden, encoder_outputs, w=None, b=None, *, method="general"):
    if method == "general":
        energy = jnp.einsum("sbh,kh->sbk", encoder_outputs, w) + b
    else:
        energy = encoder_outputs
    scores = jnp.sum(hidden * energy, axis=2)            # [S, B]
    scores = scores.T                                     # [B, S]
    return jax.nn.softmax(scores, axis=1)[:, None, :]     # [B, 1, S]


if __name__ == "__main__":
    batch = 2
    seq = 8
    hidden_size = 32

    key = jax.random.PRNGKey(0)
    k_hid, k_enc, k_w, k_b = jax.random.split(key, 4)

    hidden = jax.random.normal(k_hid, (1, batch, hidden_size), dtype=jnp.float32)
    encoder_outputs = jax.random.normal(
        k_enc, (seq, batch, hidden_size), dtype=jnp.float32
    )
    # Deterministic Linear(hidden_size, hidden_size) params (torch: y = x W^T + b)
    w = jax.random.normal(k_w, (hidden_size, hidden_size), dtype=jnp.float32) * 0.1
    b = jax.random.normal(k_b, (hidden_size,), dtype=jnp.float32) * 0.1

    # 'general' attention (Linear folded into the query projection)
    out_general = jax.block_until_ready(
        attention_forward(hidden, encoder_outputs, w, b, method="general")
    )
    ref_general = _reference(hidden, encoder_outputs, w, b, method="general")

    # 'dot' attention
    out_dot = jax.block_until_ready(
        attention_forward(hidden, encoder_outputs, method="dot")
    )
    ref_dot = _reference(hidden, encoder_outputs, method="dot")

    assert out_general.shape == (batch, 1, seq)
    assert out_dot.shape == (batch, 1, seq)
    # Tolerance loosened slightly: the bias is dropped (exact under softmax but
    # changes low-order bits) and the softmax reciprocal uses the EUP approx path.
    assert jnp.allclose(out_general, ref_general, atol=2e-3, rtol=2e-3)
    assert jnp.allclose(out_dot, ref_dot, atol=2e-3, rtol=2e-3)

    print("KERNEL_OK")
</pallas_src>

<mosaic_0001>
module attributes {stable_mosaic.version = 11 : i64} {
  func.func @_attn_softmax_kernel(%arg0: i32, %arg1: memref<2x32xf32, #tpu.memory_space<vmem>>, %arg2: memref<8x2x32xf32, #tpu.memory_space<vmem>>, %arg3: memref<2x8xf32, #tpu.memory_space<vmem>>) attributes {dimension_semantics = [#tpu.dimension_semantics<parallel>], iteration_bounds = array<i64: 1>, scalar_prefetch = 0 : i64, scratch_operands = 0 : i64, tpu.core_type = #tpu.core_type<tc>, window_params = [{transform_indices = @transform_0, window_bounds = array<i64: 2, 32>}, {transform_indices = @transform_1, window_bounds = array<i64: 8, 2, 32>}, {transform_indices = @transform_2, window_bounds = array<i64: 2, 8>}]} {
    %c0 = arith.constant 0 : index
    %c0_0 = arith.constant 0 : index
    %0 = vector.load %arg1[%c0, %c0_0] : memref<2x32xf32, #tpu.memory_space<vmem>>, vector<2x32xf32>
    %c0_1 = arith.constant 0 : index
    %c0_2 = arith.constant 0 : index
    %c0_3 = arith.constant 0 : index
    %1 = vector.load %arg2[%c0_1, %c0_2, %c0_3] : memref<8x2x32xf32, #tpu.memory_space<vmem>>, vector<8x2x32xf32>
    %2 = vector.shape_cast %0 : vector<2x32xf32> to vector<1x2x32xf32>
    %3 = vector.broadcast %2 : vector<1x2x32xf32> to vector<8x2x32xf32>
    %4 = arith.mulf %1, %3 : vector<8x2x32xf32>
    %cst = arith.constant dense<0.000000e+00> : vector<8x2xf32>
    %5 = vector.multi_reduction <add>, %4, %cst [2] : vector<8x2x32xf32> to vector<8x2xf32>
    %6 = tpu.transpose %5, [1, 0] : vector<8x2xf32> -> vector<2x8xf32>
    %cst_4 = arith.constant dense<0xFF800000> : vector<2xf32>
    %7 = vector.multi_reduction <maximumf>, %6, %cst_4 [1] : vector<2x8xf32> to vector<2xf32>
    %8 = vector.shape_cast %7 : vector<2xf32> to vector<2x1xf32>
    %9 = vector.broadcast %8 : vector<2x1xf32> to vector<2x8xf32>
    %10 = arith.subf %6, %9 : vector<2x8xf32>
    %11 = math.exp %10 : vector<2x8xf32>
    %cst_5 = arith.constant dense<0.000000e+00> : vector<2xf32>
    %12 = vector.multi_reduction <add>, %11, %cst_5 [1] : vector<2x8xf32> to vector<2xf32>
    %13 = vector.shape_cast %12 : vector<2xf32> to vector<2x1xf32>
    %14 = tpu.reciprocal %13 {approx = true} : vector<2x1xf32> -> vector<2x1xf32>
    %15 = vector.broadcast %14 : vector<2x1xf32> to vector<2x8xf32>
    %16 = arith.mulf %11, %15 : vector<2x8xf32>
    %c0_6 = arith.constant 0 : index
    %c0_7 = arith.constant 0 : index
    %17 = vector.load %arg3[%c0_6, %c0_7] : memref<2x8xf32, #tpu.memory_space<vmem>>, vector<2x8xf32>
    tpu.vector_store %arg3[%c0_6, %c0_7], %16 {strides = array<i32>} : memref<2x8xf32, #tpu.memory_space<vmem>>, vector<2x8xf32>,
    return
  }
  func.func @transform_0(%arg0: i32) -> (i32, i32) {
    %c0_i32 = arith.constant 0 : i32
    %c0_i32_0 = arith.constant 0 : i32
    return %arg0, %c0_i32 : i32, i32
  }
  func.func @transform_1(%arg0: i32) -> (i32, i32, i32) {
    %c0_i32 = arith.constant 0 : i32
    %c0_i32_0 = arith.constant 0 : i32
    %c0_i32_1 = arith.constant 0 : i32
    return %c0_i32, %arg0, %c0_i32_0 : i32, i32, i32
  }
  func.func @transform_2(%arg0: i32) -> (i32, i32) {
    %c0_i32 = arith.constant 0 : i32
    %c0_i32_0 = arith.constant 0 : i32
    return %arg0, %c0_i32 : i32, i32
  }
}

</mosaic_0001>

<llo_original>
// kernel: attention_forward.1
$region0: #{attention_forward.1}
  #allocation0 [shape = 'u32[]', space=smem, size = 0x4, offset = 0x4, fixed_abs, tag = 'smem constant byte address 0x4 - core index']
  #allocation1 [shape = 'u32[144,128]{1,0:T(1,128)}', space=vmem, size = 0x12000, scoped, tag = 'internal scratch']
  %s0 = inlined_call_operand.vmem [shape: f32[2,32], index: 0, kind: input, shape index: {}]
  %s1 = inlined_call_operand.vmem [shape: f32[8,2,32], index: 1, kind: input, shape index: {}]
  %s2 = inlined_call_operand.hbm [shape: f32[2,8], index: 2, kind: output, shape index: {}]
  %s3 = sld [smem:[#allocation0]]
  $region18: #{attention_forward.1} parent=0
    _
  %s5 = ssub.s32 1, %s3
  %s6 = scalar_select 0, %s5, %s3
  $region1: #{attention_forward.1} parent=0
    #allocation2 [shape = 'u8[1024]{0}', space=vmem, size = 0x400, scoped, tag = 'output window, operand 0, single buffered']
    #allocation3 [shape = 's32[1]{0}', space=sflag, size = 0x4, scoped, tag = 'scoped memory for attention_forward.1']
    %7 = vsyncpa [#allocation3], 0
    // Predicated region
    $region2: #{attention_forward.1} parent=1 // pred_check
      _
    $region3: #{attention_forward.1} parent=1 // pred_check_branch
      %9 = sbr.rel (0) target = $region5
    $region4: #{attention_forward.1} parent=1 // pred_region
      _
    $region5: #{attention_forward.1} parent=1 // pred_fallthru
      _
    // Predicated region
    $region6: #{attention_forward.1} parent=1 // pred_check
      _
    $region7: #{attention_forward.1} parent=1 // pred_check_branch
      %11 = sbr.rel (0) target = $region9
    $region8: #{attention_forward.1} parent=1 // pred_region
      _
    $region9: #{attention_forward.1} parent=1 // pred_fallthru
      _
    %v12 = vld [vmem:[%s0] sm:$0x3]
    %v13 = vld [vmem:[%s1] sm:$0x3]
    %v14 = vld [vmem:[%s1 + $0x2] sm:$0x3]
    %v15 = vld [vmem:[%s1 + $0x4] sm:$0x3]
    %v16 = vld [vmem:[%s1 + $0x6] sm:$0x3]
    %v17 = vld [vmem:[%s1 + $0x8] sm:$0x3]
    %v18 = vld [vmem:[%s1 + $0xa] sm:$0x3]
    %v19 = vld [vmem:[%s1 + $0xc] sm:$0x3]
    %v20 = vld [vmem:[%s1 + $0xe] sm:$0x3]
    %v21 = vmul.f32 %v13, %v12
    %v22 = vmul.f32 %v14, %v12
    %v23 = vmul.f32 %v15, %v12
    %v24 = vmul.f32 %v16, %v12
    %v25 = vmul.f32 %v17, %v12
    %v26 = vmul.f32 %v18, %v12
    %v27 = vmul.f32 %v19, %v12
    %v28 = vmul.f32 %v20, %v12
    %vm29 = vcmask 254976
    %v30 = vsel %vm29, %v21, 0.0
    %31 = vadd.xlane.f32.xlu0 %v30
    %v32 = vpop.xlane.xlu0 %31
    %v33 = vsel %vm29, %v22, 0.0
    %34 = vadd.xlane.f32.xlu0 %v33
    %v35 = vpop.xlane.xlu0 %34
    %v36 = vsel %vm29, %v23, 0.0
    %37 = vadd.xlane.f32.xlu0 %v36
    %v38 = vpop.xlane.xlu0 %37
    %v39 = vsel %vm29, %v24, 0.0
    %40 = vadd.xlane.f32.xlu0 %v39
    %v41 = vpop.xlane.xlu0 %40
    %v42 = vsel %vm29, %v25, 0.0
    %43 = vadd.xlane.f32.xlu0 %v42
    %v44 = vpop.xlane.xlu0 %43
    %v45 = vsel %vm29, %v26, 0.0
    %46 = vadd.xlane.f32.xlu0 %v45
    %v47 = vpop.xlane.xlu0 %46
    %v48 = vsel %vm29, %v27, 0.0
    %49 = vadd.xlane.f32.xlu0 %v48
    %v50 = vpop.xlane.xlu0 %49
    %v51 = vsel %vm29, %v28, 0.0
    %52 = vadd.xlane.f32.xlu0 %v51
    %v53 = vpop.xlane.xlu0 %52
    %v62 = vlaneseq
    %v63 = vand.u32 %v62, 127
    %v64 = vlaneseq
    %v65 = vshrl.u32 %v64, 7
    %v66 = vsub.s32 %v63, %v65
    %v67 = vrot.slane %v32, %v66
    %v68 = vlaneseq
    %v69 = vshrl.u32 %v68, 7
    %v70 = vsub.s32 %v63, %v69
    %v71 = vrot.slane %v35, %v70
    %v72 = vlaneseq
    %v73 = vshrl.u32 %v72, 7
    %v74 = vsub.s32 %v63, %v73
    %v75 = vrot.slane %v38, %v74
    %v76 = vlaneseq
    %v77 = vshrl.u32 %v76, 7
    %v78 = vsub.s32 %v63, %v77
    %v79 = vrot.slane %v41, %v78
    %v80 = vlaneseq
    %v81 = vshrl.u32 %v80, 7
    %v82 = vsub.s32 %v63, %v81
    %v83 = vrot.slane %v44, %v82
    %v84 = vlaneseq
    %v85 = vshrl.u32 %v84, 7
    %v86 = vsub.s32 %v63, %v85
    %v87 = vrot.slane %v47, %v86
    %v88 = vlaneseq
    %v89 = vshrl.u32 %v88, 7
    %v90 = vsub.s32 %v63, %v89
    %v91 = vrot.slane %v50, %v90
    %v92 = vlaneseq
    %v93 = vshrl.u32 %v92, 7
    %v94 = vsub.s32 %v63, %v93
    %v95 = vrot.slane %v53, %v94
    %vm96 = vcmask 1041409
    %v97 = vsel %vm96, %v71, %v67
    %vm98 = vcmask 1042434
    %v99 = vsel %vm98, %v75, %v97
    %vm100 = vcmask 1043459
    %v101 = vsel %vm100, %v79, %v99
    %vm102 = vcmask 1044484
    %v103 = vsel %vm102, %v83, %v101
    %vm104 = vcmask 1045509
    %v105 = vsel %vm104, %v87, %v103
    %vm106 = vcmask 1046534
    %v107 = vsel %vm106, %v91, %v105
    %vm108 = vcmask 1047559
    %v109 = vsel %vm108, %v95, %v107
    %111 = vxpose.xlu0.b32.start [1/16] %v109, 128
    %112 = vxpose.xlu0.b32.cont [2/16] 0.0, 128
    %113 = vxpose.xlu0.b32.cont [3/16] 0.0, 128
    %114 = vxpose.xlu0.b32.cont [4/16] 0.0, 128
    %115 = vxpose.xlu0.b32.cont [5/16] 0.0, 128
    %116 = vxpose.xlu0.b32.cont [6/16] 0.0, 128
    %117 = vxpose.xlu0.b32.cont [7/16] 0.0, 128
    %118 = vxpose.xlu0.b32.cont [8/16] 0.0, 128
    %119 = vxpose.xlu0.b32.cont [9/16] 0.0, 128
    %120 = vxpose.xlu0.b32.cont [10/16] 0.0, 128
    %121 = vxpose.xlu0.b32.cont [11/16] 0.0, 128
    %122 = vxpose.xlu0.b32.cont [12/16] 0.0, 128
    %123 = vxpose.xlu0.b32.cont [13/16] 0.0, 128
    %124 = vxpose.xlu0.b32.cont [14/16] 0.0, 128
    %125 = vxpose.xlu0.b32.cont [15/16] 0.0, 128
    %126 = vxpose.xlu0.b32.end [16/16] 0.0, 128
    %v127 = vpop.trf.xlu0
    %v128 = vpop.trf.xlu0
    %v129 = vpop.trf.xlu0
    %v130 = vpop.trf.xlu0
    %v131 = vpop.trf.xlu0
    %v132 = vpop.trf.xlu0
    %v133 = vpop.trf.xlu0
    %v134 = vpop.trf.xlu0
    %v135 = vpop.trf.xlu0
    %v136 = vpop.trf.xlu0
    %v137 = vpop.trf.xlu0
    %v138 = vpop.trf.xlu0
    %v139 = vpop.trf.xlu0
    %v140 = vpop.trf.xlu0
    %v141 = vpop.trf.xlu0
    %v142 = vpop.trf.xlu0
    %vm143 = vcmask 58368
    %v144 = vsel %vm143, %v127, -inf
    %145 = vmax.xlane.f32.xlu0 %v144
    %v146 = vpop.xlane.xlu0 %145
    %v147 = vsub.f32 %v127, %v146
    %v148 = vmul.f32 %v147, 1.442695
    %v149 = vpow.pop %v148
    %v150 = vsel %vm143, %v149, 0.0
    %151 = vadd.xlane.f32.xlu0 %v150
    %v152 = vpop.xlane.xlu0 %151
    %v153 = vrcp.pop %v152
    %v154 = vmul.f32 %v149, %v153
    %155 = vst.msk [vmem:[#allocation2] sm:$0x3] %vm143, %v154
    // Predicated region
    $region10: #{attention_forward.1} parent=1 // pred_check
      _
    $region11: #{attention_forward.1} parent=1 // pred_check_branch
      %157 = sbr.rel (0) target = $region13
    $region12: #{attention_forward.1} parent=1 // pred_region
      %s159 = ssub.s32 32, 32
      %160 = vsyncadd [#allocation3], %s159
      %s162 = sshll.u32 [#allocation2], 4
      %s163 = int_to_ptr.vmem [resolvable:$true] %s162
      %165 = dma.vmem_to_hbm [thread:$0]  %s163, 32, %s2, [#allocation3]
    $region13: #{attention_forward.1} parent=1 // pred_fallthru
      _
    // Predicated region
    $region14: #{attention_forward.1} parent=1 // pred_check
      _
    $region15: #{attention_forward.1} parent=1 // pred_check_branch
      %167 = sbr.rel (0) target = $region17
    $region16: #{attention_forward.1} parent=1 // pred_region
      %168 = dma.done [#allocation3], 32
    $region17: #{attention_forward.1} parent=1 // pred_fallthru
      _
    %169 = vsyncpa [#allocation3], 1

</llo_original>
